<compile_context>
chip_gen: v6e
topology: v6e:2x2x1
jax: 0.10.0
libtpu: 0.0.40
codegen_flags: <defaults>
</compile_context>

<pallas_src>
import functools

import jax
import jax.numpy as jnp
from jax.experimental import pallas as pl
from jax.experimental.pallas import tpu as pltpu


def _round_up(v: int, m: int) -> int:
    return ((v + m - 1) // m) * m


def _swin_highway_kernel(x_ref, gamma_ref, beta_ref, w_ref, b_ref,
                         logits_ref, pooled_ref, acc_ref, macc_ref,
                         *, eps: float, true_l: int, true_c: int,
                         l_tile: int, mask_rows: bool):
    li = pl.program_id(1)

    @pl.when(li == 0)
    def _init():
        acc_ref[...] = jnp.zeros_like(acc_ref)
        macc_ref[...] = jnp.zeros_like(macc_ref)

    x = x_ref[...].astype(jnp.float32)                 # (bt, lt, C), unpadded C

    # Single-pass LayerNorm moments over the (real, unpadded) channel dim.
    inv_c = 1.0 / float(true_c)
    s1 = jnp.sum(x, axis=-1, keepdims=True)            # XLU cross-lane reduce
    s2 = jnp.sum(x * x, axis=-1, keepdims=True)        # 1 VALU mul/elem + XLU
    mean = s1 * inv_c                                   # (bt, lt, 1)
    var = s2 * inv_c - mean * mean
    inv_std = jax.lax.rsqrt(var + eps)                  # EUP, per-row scalar

    # sum_L((x - mean) * inv_std) == sum_L(x * inv_std) - sum_L(mean * inv_std):
    # only one broadcast multiply per element; the mean term is per-row scalars.
    contrib = x * inv_std                               # 1 VALU mul/elem
    row_term = mean * inv_std                           # (bt, lt, 1)

    if mask_rows:  # only traced when L % l_tile != 0 (ragged last tile)
        row = li * l_tile + jax.lax.broadcasted_iota(
            jnp.int32, (x.shape[0], x.shape[1], 1), 1)
        valid = row < true_l
        contrib = jnp.where(valid, contrib, 0.0)
        row_term = jnp.where(valid, row_term, 0.0)

    acc_ref[...] += jnp.sum(contrib, axis=1)            # (bt, C)
    macc_ref[...] += jnp.sum(row_term, axis=1)          # (bt, 1)

    @pl.when(li == pl.num_programs(1) - 1)
    def _finalize():
        inv_l = 1.0 / float(true_l)
        pooled = (acc_ref[...] - macc_ref[...]) * inv_l        # mean over tokens
        pooled = pooled * gamma_ref[...] + beta_ref[...]        # hoisted LN affine
        pooled_ref[0] = pooled.astype(pooled_ref.dtype)
        logits = jnp.dot(pooled, w_ref[...],
                         preferred_element_type=jnp.float32) + b_ref[...]
        logits_ref[0] = logits.astype(logits_ref.dtype)


def swin_highway_forward(x, gamma, beta, w, b, *,
                         eps: float = 1e-5, b_tile: int = 8, l_tile=None):
    """x: (B, L, C) f32 or bf16 (bf16 streamed as-is); gamma/beta: (C,);
    w: (C, N); b: (N,).  Returns (logits (B, N) f32, pooled (B, C) f32)."""
    B, L, C = x.shape
    N = w.shape[1]
    itemsize = jnp.dtype(x.dtype).itemsize

    gamma2 = gamma.reshape(1, C).astype(jnp.float32)
    beta2 = beta.reshape(1, C).astype(jnp.float32)
    w2 = w.astype(jnp.float32)
    b2 = b.reshape(1, N).astype(jnp.float32)

    # v7x has 2 TensorCores: keep >= 2 B-tiles whenever B >= 2 so the "parallel"
    # B axis really shards (v5e/v6e: 1 TC, the extra grid step is negligible).
    bt = max(1, min(b_tile, (B + 1) // 2)) if B > 1 else 1
    # TODO(synk): for B == 1, split the L reduction across the two v7x cores
    # (size-2 parallel grid axis + per-core partial acc output + tiny combine).

    try:
        vmem_cap = int(getattr(pltpu.get_tpu_info(), "vmem_capacity_bytes",
                               64 * 1024 * 1024))
    except Exception:
        vmem_cap = 64 * 1024 * 1024  # conservative (v7x per-core size)

    lane_c = _round_up(C, 128)   # VMEM lane padding of the C dim
    lane_n = _round_up(N, 128)

    # L tile: amortize the ~0.35us/step overhead with big blocks; budget is in
    # *padded* VMEM bytes so double-buffered x stays ~1/4 of VMEM per generation.
    if l_tile is not None:
        lt = L if l_tile >= L else max(8, (min(int(l_tile), L) // 8) * 8)
    else:
        buf_budget = vmem_cap // 8
        lt_budget = max(8, buf_budget // max(1, bt * lane_c * itemsize))
        if L <= lt_budget:
            lt = L                                   # single pass, no mask
        else:
            lt = 0
            for d in range(8, (lt_budget // 8) * 8 + 1, 8):
                if L % d == 0:                       # multiple-of-8 divisor of L
                    lt = d
            if lt == 0:
                lt = (lt_budget // 8) * 8            # fallback: ragged last tile
    mask_rows = bool(L % lt != 0)

    grid_b = pl.cdiv(B, bt)
    grid_l = pl.cdiv(L, lt)
    grid = (grid_b, grid_l)

    # Per-generation VMEM limit from actual padded usage + headroom
    # (well under 64 MiB physical on v7x, generous on v5e/v6e's 128 MiB).
    x_blk = bt * _round_up(lt, 8) * lane_c * itemsize
    w_vm = _round_up(C, 8) * lane_n * 4
    vec_vm = 2 * 8 * lane_c * 4 + 8 * lane_n * 4
    out_vm = 8 * (lane_n + lane_c) * 4
    scr_vm = _round_up(bt, 8) * (lane_c + 128) * 4
    needed = 2 * x_blk + 2 * (w_vm + vec_vm + out_vm) + scr_vm
    vmem_limit = max(needed + 8 * 1024 * 1024, 32 * 1024 * 1024)
    vmem_limit = int(min(vmem_limit, (5 * vmem_cap) // 8, 100 * 1024 * 1024))

    kernel = functools.partial(_swin_highway_kernel, eps=eps, true_l=L,
                               true_c=C, l_tile=lt, mask_rows=mask_rows)

    logits_p, pooled_p = pl.pallas_call(
        kernel,
        out_shape=(
            jax.ShapeDtypeStruct((grid_b, bt, N), jnp.float32),
            jax.ShapeDtypeStruct((grid_b, bt, C), jnp.float32),
        ),
        grid_spec=pltpu.PrefetchScalarGridSpec(
            num_scalar_prefetch=0,
            grid=grid,
            in_specs=[
                # x streamed unpadded: last block dim == full C (no 8/128 rule).
                pl.BlockSpec((bt, lt, C), lambda bi, li: (bi, li, 0)),
                pl.BlockSpec((1, C), lambda bi, li: (0, 0)),      # gamma
                pl.BlockSpec((1, C), lambda bi, li: (0, 0)),      # beta
                pl.BlockSpec((C, N), lambda bi, li: (0, 0)),      # W
                pl.BlockSpec((1, N), lambda bi, li: (0, 0)),      # bias
            ],
            out_specs=(
                pl.BlockSpec((1, bt, N), lambda bi, li: (bi, 0, 0)),   # logits
                pl.BlockSpec((1, bt, C), lambda bi, li: (bi, 0, 0)),   # pooled
            ),
            scratch_shapes=[
                pltpu.VMEM((bt, C), jnp.float32),   # sum_L(x * inv_std)
                pltpu.VMEM((bt, 1), jnp.float32),   # sum_L(mean * inv_std)
            ],
        ),
        compiler_params=pltpu.CompilerParams(
            dimension_semantics=("parallel", "arbitrary"),
            vmem_limit_bytes=vmem_limit,
        ),
    )(x, gamma2, beta2, w2, b2)

    logits = logits_p.reshape(grid_b * bt, N)[:B]
    pooled = pooled_p.reshape(grid_b * bt, C)[:B]
    return logits, pooled


def _reference(x, gamma, beta, w, b, eps=1e-5):
    x = x.astype(jnp.float32)
    mean = jnp.mean(x, axis=-1, keepdims=True)
    var = jnp.mean((x - mean) ** 2, axis=-1, keepdims=True)
    y = (x - mean) / jnp.sqrt(var + eps) * gamma + beta
    pooled = jnp.mean(y, axis=1)
    logits = pooled @ w + b
    return logits, pooled


if __name__ == "__main__":
    # Small shapes consistent with the module: embed_dim=32, stage=1 -> C=32,
    # an 8x8 token grid -> L=64, num_labels=10, batch=2.
    B, L, C, N = 2, 64, 32, 10
    eps = 1e-5

    key = jax.random.PRNGKey(0)
    kx, kg, kbeta, kw, kb = jax.random.split(key, 5)

    x = jax.random.normal(kx, (B, L, C), dtype=jnp.float32)
    gamma = 1.0 + 0.1 * jax.random.normal(kg, (C,), dtype=jnp.float32)
    beta = 0.1 * jax.random.normal(kbeta, (C,), dtype=jnp.float32)
    bound = 1.0 / (C ** 0.5)   # nn.Linear default init scale
    w = jax.random.uniform(kw, (C, N), minval=-bound, maxval=bound, dtype=jnp.float32)
    b = jax.random.uniform(kb, (N,), minval=-bound, maxval=bound, dtype=jnp.float32)

    ref_logits, ref_pooled = _reference(x, gamma, beta, w, b, eps=eps)

    # 1) l_tile=16 -> 4 L-steps (init/accumulate/finalize) + 2 parallel B tiles.
    logits, pooled = swin_highway_forward(x, gamma, beta, w, b, eps=eps, l_tile=16)
    jax.block_until_ready((logits, pooled))
    assert jnp.allclose(pooled, ref_pooled, atol=5e-4, rtol=5e-4), \
        float(jnp.max(jnp.abs(pooled - ref_pooled)))
    assert jnp.allclose(logits, ref_logits, atol=5e-4, rtol=5e-4), \
        float(jnp.max(jnp.abs(logits - ref_logits)))

    # 2) ragged sequence (L % l_tile != 0) exercises the masked-tail path.
    L2 = 40
    x2 = jax.random.normal(kx, (B, L2, C), dtype=jnp.float32)
    logits2, pooled2 = swin_highway_forward(x2, gamma, beta, w, b, eps=eps, l_tile=16)
    jax.block_until_ready((logits2, pooled2))
    ref_logits2, ref_pooled2 = _reference(x2, gamma, beta, w, b, eps=eps)
    assert jnp.allclose(pooled2, ref_pooled2, atol=5e-4, rtol=5e-4), \
        float(jnp.max(jnp.abs(pooled2 - ref_pooled2)))
    assert jnp.allclose(logits2, ref_logits2, atol=5e-4, rtol=5e-4), \
        float(jnp.max(jnp.abs(logits2 - ref_logits2)))

    # 3) auto-tiled path (VMEM-budgeted block, single L step here).
    logits3, pooled3 = swin_highway_forward(x, gamma, beta, w, b, eps=eps)
    jax.block_until_ready((logits3, pooled3))
    assert jnp.allclose(pooled3, ref_pooled, atol=5e-4, rtol=5e-4)
    assert jnp.allclose(logits3, ref_logits, atol=5e-4, rtol=5e-4)

    print("KERNEL_OK")
</pallas_src>

<mosaic_0001>
module attributes {stable_mosaic.version = 11 : i64} {
  func.func @_swin_highway_kernel(%arg0: i32, %arg1: i32, %arg2: memref<1x16x32xf32, #tpu.memory_space<vmem>>, %arg3: memref<1x32xf32, #tpu.memory_space<vmem>>, %arg4: memref<1x32xf32, #tpu.memory_space<vmem>>, %arg5: memref<32x10xf32, #tpu.memory_space<vmem>>, %arg6: memref<1x10xf32, #tpu.memory_space<vmem>>, %arg7: memref<1x1x10xf32, #tpu.memory_space<vmem>>, %arg8: memref<1x1x32xf32, #tpu.memory_space<vmem>>, %arg9: memref<1x32xf32, #tpu.memory_space<vmem>>, %arg10: memref<1x1xf32, #tpu.memory_space<vmem>>) attributes {dimension_semantics = [#tpu.dimension_semantics<parallel>, #tpu.dimension_semantics<arbitrary>], iteration_bounds = array<i64: 2, 4>, scalar_prefetch = 0 : i64, scratch_operands = 2 : i64, tpu.core_type = #tpu.core_type<tc>, window_params = [{transform_indices = @transform_0, window_bounds = array<i64: 1, 16, 32>}, {pipeline_mode = #tpu.pipeline_mode<synchronous>, transform_indices = @transform_1, window_bounds = array<i64: 1, 32>}, {pipeline_mode = #tpu.pipeline_mode<synchronous>, transform_indices = @transform_2, window_bounds = array<i64: 1, 32>}, {pipeline_mode = #tpu.pipeline_mode<synchronous>, transform_indices = @transform_3, window_bounds = array<i64: 32, 10>}, {pipeline_mode = #tpu.pipeline_mode<synchronous>, transform_indices = @transform_4, window_bounds = array<i64: 1, 10>}, {transform_indices = @transform_5, window_bounds = array<i64: 1, 1, 10>}, {transform_indices = @transform_6, window_bounds = array<i64: 1, 1, 32>}]} {
    %c0_i32 = arith.constant 0 : i32
    %0 = arith.cmpi eq, %arg1, %c0_i32 : i32
    %1 = arith.extui %0 : i1 to i32
    %c0_i32_0 = arith.constant 0 : i32
    %2 = arith.cmpi ne, %1, %c0_i32_0 : i32
    scf.if %2 {
      %cst_18 = arith.constant 0.000000e+00 : f32
      %32 = vector.broadcast %cst_18 : f32 to vector<1x32xf32>
      %c0_19 = arith.constant 0 : index
      %c0_20 = arith.constant 0 : index
      %33 = vector.load %arg9[%c0_19, %c0_20] : memref<1x32xf32, #tpu.memory_space<vmem>>, vector<1x32xf32>
      tpu.vector_store %arg9[%c0_19, %c0_20], %32 {strides = array<i32>} : memref<1x32xf32, #tpu.memory_space<vmem>>, vector<1x32xf32>,
      %cst_21 = arith.constant 0.000000e+00 : f32
      %34 = vector.broadcast %cst_21 : f32 to vector<1x1xf32>
      %c0_22 = arith.constant 0 : index
      %c0_23 = arith.constant 0 : index
      %35 = vector.load %arg10[%c0_22, %c0_23] : memref<1x1xf32, #tpu.memory_space<vmem>>, vector<1x1xf32>
      tpu.vector_store %arg10[%c0_22, %c0_23], %34 {strides = array<i32>} : memref<1x1xf32, #tpu.memory_space<vmem>>, vector<1x1xf32>,
    } else {
    }
    %c0 = arith.constant 0 : index
    %c0_1 = arith.constant 0 : index
    %c0_2 = arith.constant 0 : index
    %3 = vector.load %arg2[%c0, %c0_1, %c0_2] : memref<1x16x32xf32, #tpu.memory_space<vmem>>, vector<1x16x32xf32>
    %cst = arith.constant dense<0.000000e+00> : vector<1x16xf32>
    %4 = vector.multi_reduction <add>, %3, %cst [2] : vector<1x16x32xf32> to vector<1x16xf32>
    %5 = vector.shape_cast %4 : vector<1x16xf32> to vector<1x16x1xf32>
    %6 = arith.mulf %3, %3 : vector<1x16x32xf32>
    %cst_3 = arith.constant dense<0.000000e+00> : vector<1x16xf32>
    %7 = vector.multi_reduction <add>, %6, %cst_3 [2] : vector<1x16x32xf32> to vector<1x16xf32>
    %8 = vector.shape_cast %7 : vector<1x16xf32> to vector<1x16x1xf32>
    %cst_4 = arith.constant 3.125000e-02 : f32
    %9 = vector.broadcast %cst_4 : f32 to vector<1x16x1xf32>
    %10 = arith.mulf %5, %9 : vector<1x16x1xf32>
    %cst_5 = arith.constant 3.125000e-02 : f32
    %11 = vector.broadcast %cst_5 : f32 to vector<1x16x1xf32>
    %12 = arith.mulf %8, %11 : vector<1x16x1xf32>
    %13 = arith.mulf %10, %10 : vector<1x16x1xf32>
    %14 = arith.subf %12, %13 : vector<1x16x1xf32>
    %cst_6 = arith.constant 9.99999974E-6 : f32
    %15 = vector.broadcast %cst_6 : f32 to vector<1x16x1xf32>
    %16 = arith.addf %14, %15 : vector<1x16x1xf32>
    %17 = math.rsqrt %16 : vector<1x16x1xf32>
    %18 = vector.broadcast %17 : vector<1x16x1xf32> to vector<1x16x32xf32>
    %19 = arith.mulf %3, %18 : vector<1x16x32xf32>
    %20 = arith.mulf %10, %17 : vector<1x16x1xf32>
    %c0_7 = arith.constant 0 : index
    %c0_8 = arith.constant 0 : index
    %21 = vector.load %arg9[%c0_7, %c0_8] : memref<1x32xf32, #tpu.memory_space<vmem>>, vector<1x32xf32>
    %cst_9 = arith.constant dense<0.000000e+00> : vector<1x32xf32>
    %22 = vector.multi_reduction <add>, %19, %cst_9 [1] : vector<1x16x32xf32> to vector<1x32xf32>
    %23 = arith.addf %21, %22 : vector<1x32xf32>
    %c0_10 = arith.constant 0 : index
    %c0_11 = arith.constant 0 : index
    %24 = vector.load %arg9[%c0_10, %c0_11] : memref<1x32xf32, #tpu.memory_space<vmem>>, vector<1x32xf32>
    tpu.vector_store %arg9[%c0_10, %c0_11], %23 {strides = array<i32>} : memref<1x32xf32, #tpu.memory_space<vmem>>, vector<1x32xf32>,
    %c0_12 = arith.constant 0 : index
    %c0_13 = arith.constant 0 : index
    %25 = vector.load %arg10[%c0_12, %c0_13] : memref<1x1xf32, #tpu.memory_space<vmem>>, vector<1x1xf32>
    %cst_14 = arith.constant dense<0.000000e+00> : vector<1x1xf32>
    %26 = vector.multi_reduction <add>, %20, %cst_14 [1] : vector<1x16x1xf32> to vector<1x1xf32>
    %27 = arith.addf %25, %26 : vector<1x1xf32>
    %c0_15 = arith.constant 0 : index
    %c0_16 = arith.constant 0 : index
    %28 = vector.load %arg10[%c0_15, %c0_16] : memref<1x1xf32, #tpu.memory_space<vmem>>, vector<1x1xf32>
    tpu.vector_store %arg10[%c0_15, %c0_16], %27 {strides = array<i32>} : memref<1x1xf32, #tpu.memory_space<vmem>>, vector<1x1xf32>,
    %c3_i32 = arith.constant 3 : i32
    %29 = arith.cmpi eq, %arg1, %c3_i32 : i32
    %30 = arith.extui %29 : i1 to i32
    %c0_i32_17 = arith.constant 0 : i32
    %31 = arith.cmpi ne, %30, %c0_i32_17 : i32
    scf.if %31 {
      %c0_18 = arith.constant 0 : index
      %c0_19 = arith.constant 0 : index
      %32 = vector.load %arg9[%c0_18, %c0_19] : memref<1x32xf32, #tpu.memory_space<vmem>>, vector<1x32xf32>
      %c0_20 = arith.constant 0 : index
      %c0_21 = arith.constant 0 : index
      %33 = vector.load %arg10[%c0_20, %c0_21] : memref<1x1xf32, #tpu.memory_space<vmem>>, vector<1x1xf32>
      %34 = vector.broadcast %33 : vector<1x1xf32> to vector<1x32xf32>
      %35 = arith.subf %32, %34 : vector<1x32xf32>
      %cst_22 = arith.constant 1.562500e-02 : f32
      %36 = vector.broadcast %cst_22 : f32 to vector<1x32xf32>
      %37 = arith.mulf %35, %36 : vector<1x32xf32>
      %c0_23 = arith.constant 0 : index
      %c0_24 = arith.constant 0 : index
      %38 = vector.load %arg3[%c0_23, %c0_24] : memref<1x32xf32, #tpu.memory_space<vmem>>, vector<1x32xf32>
      %39 = arith.mulf %37, %38 : vector<1x32xf32>
      %c0_25 = arith.constant 0 : index
      %c0_26 = arith.constant 0 : index
      %40 = vector.load %arg4[%c0_25, %c0_26] : memref<1x32xf32, #tpu.memory_space<vmem>>, vector<1x32xf32>
      %41 = arith.addf %39, %40 : vector<1x32xf32>
      %c0_27 = arith.constant 0 : index
      %c0_28 = arith.constant 0 : index
      %c0_29 = arith.constant 0 : index
      %42 = vector.load %arg8[%c0_27, %c0_28, %c0_29] : memref<1x1x32xf32, #tpu.memory_space<vmem>>, vector<1x1x32xf32>
      %43 = vector.shape_cast %42 : vector<1x1x32xf32> to vector<1x32xf32>
      %44 = vector.shape_cast %41 : vector<1x32xf32> to vector<1x1x32xf32>
      tpu.vector_store %arg8[%c0_27, %c0_28, %c0_29], %44 {strides = array<i32>} : memref<1x1x32xf32, #tpu.memory_space<vmem>>, vector<1x1x32xf32>,
      %c0_30 = arith.constant 0 : index
      %c0_31 = arith.constant 0 : index
      %45 = vector.load %arg5[%c0_30, %c0_31] : memref<32x10xf32, #tpu.memory_space<vmem>>, vector<32x10xf32>
      %cst_32 = arith.constant dense<0.000000e+00> : vector<1x10xf32>
      %46 = tpu.matmul %41, %45, %cst_32 {dimension_numbers = #tpu.dot_dimension_numbers<[1], [0], [0], [1], [0, 0, 1, 1], [], []>} : vector<1x32xf32>, vector<32x10xf32>, vector<1x10xf32> -> vector<1x10xf32>
      %c0_33 = arith.constant 0 : index
      %c0_34 = arith.constant 0 : index
      %47 = vector.load %arg6[%c0_33, %c0_34] : memref<1x10xf32, #tpu.memory_space<vmem>>, vector<1x10xf32>
      %48 = arith.addf %46, %47 : vector<1x10xf32>
      %c0_35 = arith.constant 0 : index
      %c0_36 = arith.constant 0 : index
      %c0_37 = arith.constant 0 : index
      %49 = vector.load %arg7[%c0_35, %c0_36, %c0_37] : memref<1x1x10xf32, #tpu.memory_space<vmem>>, vector<1x1x10xf32>
      %50 = vector.shape_cast %49 : vector<1x1x10xf32> to vector<1x10xf32>
      %51 = vector.shape_cast %48 : vector<1x10xf32> to vector<1x1x10xf32>
      tpu.vector_store %arg7[%c0_35, %c0_36, %c0_37], %51 {strides = array<i32>} : memref<1x1x10xf32, #tpu.memory_space<vmem>>, vector<1x1x10xf32>,
    } else {
    }
    return
  }
  func.func @transform_0(%arg0: i32, %arg1: i32) -> (i32, i32, i32) {
    %c0_i32 = arith.constant 0 : i32
    %c0_i32_0 = arith.constant 0 : i32
    return %arg0, %arg1, %c0_i32 : i32, i32, i32
  }
  func.func @transform_1(%arg0: i32, %arg1: i32) -> (i32, i32) {
    %c0_i32 = arith.constant 0 : i32
    %c0_i32_0 = arith.constant 0 : i32
    %c0_i32_1 = arith.constant 0 : i32
    return %c0_i32, %c0_i32_0 : i32, i32
  }
  func.func @transform_2(%arg0: i32, %arg1: i32) -> (i32, i32) {
    %c0_i32 = arith.constant 0 : i32
    %c0_i32_0 = arith.constant 0 : i32
    %c0_i32_1 = arith.constant 0 : i32
    return %c0_i32, %c0_i32_0 : i32, i32
  }
  func.func @transform_3(%arg0: i32, %arg1: i32) -> (i32, i32) {
    %c0_i32 = arith.constant 0 : i32
    %c0_i32_0 = arith.constant 0 : i32
    %c0_i32_1 = arith.constant 0 : i32
    return %c0_i32, %c0_i32_0 : i32, i32
  }
  func.func @transform_4(%arg0: i32, %arg1: i32) -> (i32, i32) {
    %c0_i32 = arith.constant 0 : i32
    %c0_i32_0 = arith.constant 0 : i32
    %c0_i32_1 = arith.constant 0 : i32
    return %c0_i32, %c0_i32_0 : i32, i32
  }
  func.func @transform_5(%arg0: i32, %arg1: i32) -> (i32, i32, i32) {
    %c0_i32 = arith.constant 0 : i32
    %c0_i32_0 = arith.constant 0 : i32
    %c0_i32_1 = arith.constant 0 : i32
    return %arg0, %c0_i32, %c0_i32_0 : i32, i32, i32
  }
  func.func @transform_6(%arg0: i32, %arg1: i32) -> (i32, i32, i32) {
    %c0_i32 = arith.constant 0 : i32
    %c0_i32_0 = arith.constant 0 : i32
    %c0_i32_1 = arith.constant 0 : i32
    return %arg0, %c0_i32, %c0_i32_0 : i32, i32, i32
  }
}

</mosaic_0001>

<llo_original>
// kernel: tpu_custom_call.1
$region0: #{tpu_custom_call.1}
  #allocation0 [shape = 'u32[]', space=smem, size = 0x4, offset = 0x4, fixed_abs, tag = 'smem constant byte address 0x4 - core index']
  #allocation1 [shape = 'u32[144,128]{1,0:T(1,128)}', space=vmem, size = 0x12000, scoped, tag = 'internal scratch']
  #allocation2 [shape = 'f32[1,32]{1,0:T(1,128)}', space=vmem, size = 0x200, scoped, tag = 'scratch operand']
  #allocation3 [shape = 'f32[1,1]{1,0:T(1,128)}', space=vmem, size = 0x200, scoped, tag = 'scratch operand']
  %s0 = inlined_call_operand.vmem [shape: f32[2,64,32], index: 0, kind: input, shape index: {}]
  %s1 = inlined_call_operand.vmem [shape: f32[1,32], index: 1, kind: input, shape index: {}]
  %s2 = inlined_call_operand.vmem [shape: f32[1,32], index: 2, kind: input, shape index: {}]
  %s3 = inlined_call_operand.vmem [shape: f32[32,10], index: 3, kind: input, shape index: {}]
  %s4 = inlined_call_operand.vmem [shape: f32[1,10], index: 4, kind: input, shape index: {}]
  %s5 = inlined_call_operand.hbm [shape: f32[2,1,10], index: 5, kind: output, shape index: {0}]
  %s6 = inlined_call_operand.hbm [shape: f32[2,1,32], index: 6, kind: output, shape index: {1}]
  %7 = xla_tuple %s5, %s6
  %s8 = sld [smem:[#allocation0]]
  $region69: #{tpu_custom_call.1} parent=0
    _
  %s10 = ssub.s32 1, %s8
  %s11 = scalar_select 0, %s10, %s8
  $region1: #{tpu_custom_call.1} parent=0
    #allocation4 [shape = 'u8[1024]{0}', space=vmem, size = 0x400, scoped, tag = 'output window, operand 0']
    #allocation5 [shape = 's32[2]{0}', space=sflag, size = 0x8, scoped, tag = 'scoped memory for tpu_custom_call.1']
    #allocation6 [shape = 'u8[1024]{0}', space=vmem, size = 0x400, scoped, tag = 'output window, operand 1']
    #allocation7 [shape = 's32[2]{0}', space=sflag, size = 0x8, scoped, tag = 'scoped memory for tpu_custom_call.1']
    %12 = vsyncpa [#allocation5], 0
    %s13 = scalar_lea.sflag [#allocation5], 1
    %14 = vsyncpa %s13, 0
    %15 = vsyncpa [#allocation7], 0
    %s16 = scalar_lea.sflag [#allocation7], 1
    %17 = vsyncpa %s16, 0
    loop: start=0, step=1, limit=10
    $region2: #{tpu_custom_call.1} parent=1 // loop_pre_header
      _
    $region3: #{tpu_custom_call.1} parent=1 // loop_header
      %s19 = sphi 0, %s23
      %p20 = scmp.ge.s32.totalorder %s19, 10
      %s26 = sphi 0, %s38
      %s27 = sphi 0, %s34
      %s28 = sphi 0, %s26
      %s29 = sphi 0, %s27
      %s30 = sphi 0, %s28
      %s31 = sphi 0, %s29
      %s43 = sphi 0, %s45
      %s46 = sphi 0, %s43
      %s47 = sphi 0, %s46
      %s63 = sphi 0, %s47
      %s67 = sphi 0, %s67
      %s69 = sphi 0, %s67
      %s70 = sphi 0, %s69
      %s84 = sphi 0, %s70
      %s88 = sphi 0, %s88
      %s90 = sphi 0, %s88
      %s91 = sphi 0, %s90
      %s105 = sphi 0, %s91
      %s109 = sphi 0, %s109
      %s111 = sphi 0, %s109
      %s112 = sphi 0, %s111
      %s126 = sphi 0, %s112
      %s130 = sphi 0, %s130
      %s132 = sphi 0, %s130
      %s133 = sphi 0, %s132
      %s147 = sphi 0, %s133
      %s153 = sphi 0, %s155
      %s156 = sphi 0, %s153
      %s157 = sphi 0, %s156
      %s173 = sphi 0, %s157
      %s179 = sphi 0, %s181
      %s182 = sphi 0, %s179
      %s183 = sphi 0, %s182
      %s199 = sphi 0, %s183
    $region4: #{tpu_custom_call.1} parent=1 // loop_header_branch
      %22 = sbr.rel (%p20) target = $region8
    $region5: #{tpu_custom_call.1} parent=1 // loop_body
      %s24 = ssub.s32 %s19, 1
      %s25 = ssub.s32 %s19, 2
      %s32 = sadd.s32 1, %s27
      %p33 = scmp.ge.s32.totalorder %s32, 4
      %s34 = scalar_select %p33, 0, %s32
      %s35 = sadd.s32 1, %s26
      %s36 = scalar_select %p33, %s35, %s26
      %p37 = scmp.ge.s32.totalorder %s36, 2
      %s38 = scalar_select %p37, 0, %s36
      %s39 = ssub.s32 %s26, %s38
      %s40 = ssub.s32 %s27, %s34
      %s41 = sor.u32 %s39, %s40
      %p42 = scmp.eq.s32.totalorder %s41, 0
      %s44 = sadd.s32 %s43, 1
      %s45 = scalar_select %p42, %s43, %s44
      %p48 = pneg %p42
      %p49 = scmp.eq.s32.totalorder %s19, 7
      %p50 = por %p48, %p49
      %p51 = scmp.ne.s32.totalorder %s43, %s46
      %p52 = scmp.eq.s32.totalorder %s19, 0
      %p53 = por %p51, %p52
      %p54 = scmp.ne.s32.totalorder %s43, %s46
      %p55 = scmp.eq.s32.totalorder %s24, 7
      %p56 = por %p54, %p55
      %p57 = scmp.ne.s32.totalorder %s46, %s47
      %p58 = scmp.eq.s32.totalorder %s24, 0
      %p59 = por %p57, %p58
      %p60 = scmp.ne.s32.totalorder %s46, %s47
      %p61 = scmp.eq.s32.totalorder %s25, 7
      %p62 = por %p60, %p61
      %p64 = scmp.ne.s32.totalorder %s47, %s63
      %p65 = scmp.eq.s32.totalorder %s25, 0
      %p66 = por %p64, %p65
      %s68 = sadd.s32 %s67, 1
      %p71 = scmp.eq.s32.totalorder %s19, 7
      %p72 = scmp.ne.s32.totalorder %s67, %s69
      %p73 = scmp.eq.s32.totalorder %s19, 0
      %p74 = por %p72, %p73
      %p75 = scmp.ne.s32.totalorder %s67, %s69
      %p76 = scmp.eq.s32.totalorder %s24, 7
      %p77 = por %p75, %p76
      %p78 = scmp.ne.s32.totalorder %s69, %s70
      %p79 = scmp.eq.s32.totalorder %s24, 0
      %p80 = por %p78, %p79
      %p81 = scmp.ne.s32.totalorder %s69, %s70
      %p82 = scmp.eq.s32.totalorder %s25, 7
      %p83 = por %p81, %p82
      %p85 = scmp.ne.s32.totalorder %s70, %s84
      %p86 = scmp.eq.s32.totalorder %s25, 0
      %p87 = por %p85, %p86
      %s89 = sadd.s32 %s88, 1
      %p92 = scmp.eq.s32.totalorder %s19, 7
      %p93 = scmp.ne.s32.totalorder %s88, %s90
      %p94 = scmp.eq.s32.totalorder %s19, 0
      %p95 = por %p93, %p94
      %p96 = scmp.ne.s32.totalorder %s88, %s90
      %p97 = scmp.eq.s32.totalorder %s24, 7
      %p98 = por %p96, %p97
      %p99 = scmp.ne.s32.totalorder %s90, %s91
      %p100 = scmp.eq.s32.totalorder %s24, 0
      %p101 = por %p99, %p100
      %p102 = scmp.ne.s32.totalorder %s90, %s91
      %p103 = scmp.eq.s32.totalorder %s25, 7
      %p104 = por %p102, %p103
      %p106 = scmp.ne.s32.totalorder %s91, %s105
      %p107 = scmp.eq.s32.totalorder %s25, 0
      %p108 = por %p106, %p107
      %s110 = sadd.s32 %s109, 1
      %p113 = scmp.eq.s32.totalorder %s19, 7
      %p114 = scmp.ne.s32.totalorder %s109, %s111
      %p115 = scmp.eq.s32.totalorder %s19, 0
      %p116 = por %p114, %p115
      %p117 = scmp.ne.s32.totalorder %s109, %s111
      %p118 = scmp.eq.s32.totalorder %s24, 7
      %p119 = por %p117, %p118
      %p120 = scmp.ne.s32.totalorder %s111, %s112
      %p121 = scmp.eq.s32.totalorder %s24, 0
      %p122 = por %p120, %p121
      %p123 = scmp.ne.s32.totalorder %s111, %s112
      %p124 = scmp.eq.s32.totalorder %s25, 7
      %p125 = por %p123, %p124
      %p127 = scmp.ne.s32.totalorder %s112, %s126
      %p128 = scmp.eq.s32.totalorder %s25, 0
      %p129 = por %p127, %p128
      %s131 = sadd.s32 %s130, 1
      %p134 = scmp.eq.s32.totalorder %s19, 7
      %p135 = scmp.ne.s32.totalorder %s130, %s132
      %p136 = scmp.eq.s32.totalorder %s19, 0
      %p137 = por %p135, %p136
      %p138 = scmp.ne.s32.totalorder %s130, %s132
      %p139 = scmp.eq.s32.totalorder %s24, 7
      %p140 = por %p138, %p139
      %p141 = scmp.ne.s32.totalorder %s132, %s133
      %p142 = scmp.eq.s32.totalorder %s24, 0
      %p143 = por %p141, %p142
      %p144 = scmp.ne.s32.totalorder %s132, %s133
      %p145 = scmp.eq.s32.totalorder %s25, 7
      %p146 = por %p144, %p145
      %p148 = scmp.ne.s32.totalorder %s133, %s147
      %p149 = scmp.eq.s32.totalorder %s25, 0
      %p150 = por %p148, %p149
      %s151 = ssub.s32 %s26, %s38
      %p152 = scmp.eq.s32.totalorder %s151, 0
      %s154 = sadd.s32 %s153, 1
      %s155 = scalar_select %p152, %s153, %s154
      %p158 = pneg %p152
      %p159 = scmp.eq.s32.totalorder %s19, 7
      %p160 = por %p158, %p159
      %p161 = scmp.ne.s32.totalorder %s153, %s156
      %p162 = scmp.eq.s32.totalorder %s19, 0
      %p163 = por %p161, %p162
      %p164 = scmp.ne.s32.totalorder %s153, %s156
      %p165 = scmp.eq.s32.totalorder %s24, 7
      %p166 = por %p164, %p165
      %p167 = scmp.ne.s32.totalorder %s156, %s157
      %p168 = scmp.eq.s32.totalorder %s24, 0
      %p169 = por %p167, %p168
      %p170 = scmp.ne.s32.totalorder %s156, %s157
      %p171 = scmp.eq.s32.totalorder %s25, 7
      %p172 = por %p170, %p171
      %p174 = scmp.ne.s32.totalorder %s157, %s173
      %p175 = scmp.eq.s32.totalorder %s25, 0
      %p176 = por %p174, %p175
      %s177 = ssub.s32 %s26, %s38
      %p178 = scmp.eq.s32.totalorder %s177, 0
      %s180 = sadd.s32 %s179, 1
      %s181 = scalar_select %p178, %s179, %s180
      %p184 = pneg %p178
      %p185 = scmp.eq.s32.totalorder %s19, 7
      %p186 = por %p184, %p185
      %p187 = scmp.ne.s32.totalorder %s179, %s182
      %p188 = scmp.eq.s32.totalorder %s19, 0
      %p189 = por %p187, %p188
      %p190 = scmp.ne.s32.totalorder %s179, %s182
      %p191 = scmp.eq.s32.totalorder %s24, 7
      %p192 = por %p190, %p191
      %p193 = scmp.ne.s32.totalorder %s182, %s183
      %p194 = scmp.eq.s32.totalorder %s24, 0
      %p195 = por %p193, %p194
      %p196 = scmp.ne.s32.totalorder %s182, %s183
      %p197 = scmp.eq.s32.totalorder %s25, 7
      %p198 = por %p196, %p197
      %p200 = scmp.ne.s32.totalorder %s183, %s199
      %p201 = scmp.eq.s32.totalorder %s25, 0
      %p202 = por %p200, %p201
      %p203 = scmp.le.s32.totalorder 1, %s19
      %p204 = scmp.lt.s32.totalorder %s19, 9
      %p205 = pnand %p203, %p204
      %p206 = pneg %p205
      // Predicated region
      $region9: #{tpu_custom_call.1} parent=5 // pred_check
        _
      $region10: #{tpu_custom_call.1} parent=5 // pred_check_branch
        %208 = sbr.rel (%p205) target = $region12
      $region11: #{tpu_custom_call.1} parent=5 // pred_region
        %s209 = ssub.s32 %s19, 1
        // Predicated region
        $region13: #{tpu_custom_call.1} parent=11 // pred_check
          %p210 = pneg %p80
        $region14: #{tpu_custom_call.1} parent=11 // pred_check_branch
          %212 = sbr.rel (%p210) target = $region16
        $region15: #{tpu_custom_call.1} parent=11 // pred_region
          _
        $region16: #{tpu_custom_call.1} parent=11 // pred_fallthru
          _
        // Predicated region
        $region17: #{tpu_custom_call.1} parent=11 // pred_check
          %p213 = pneg %p101
        $region18: #{tpu_custom_call.1} parent=11 // pred_check_branch
          %215 = sbr.rel (%p213) target = $region20
        $region19: #{tpu_custom_call.1} parent=11 // pred_region
          _
        $region20: #{tpu_custom_call.1} parent=11 // pred_fallthru
          _
        // Predicated region
        $region21: #{tpu_custom_call.1} parent=11 // pred_check
          %p216 = pneg %p122
        $region22: #{tpu_custom_call.1} parent=11 // pred_check_branch
          %218 = sbr.rel (%p216) target = $region24
        $region23: #{tpu_custom_call.1} parent=11 // pred_region
          _
        $region24: #{tpu_custom_call.1} parent=11 // pred_fallthru
          _
        // Predicated region
        $region25: #{tpu_custom_call.1} parent=11 // pred_check
          %p219 = pneg %p143
        $region26: #{tpu_custom_call.1} parent=11 // pred_check_branch
          %221 = sbr.rel (%p219) target = $region28
        $region27: #{tpu_custom_call.1} parent=11 // pred_region
          _
        $region28: #{tpu_custom_call.1} parent=11 // pred_fallthru
          _
      $region12: #{tpu_custom_call.1} parent=5 // pred_fallthru
        _
      %p222 = scmp.lt.s32.totalorder %s19, 8
      // Predicated region
      $region29: #{tpu_custom_call.1} parent=5 // pred_check
        %p223 = pneg %p222
      $region30: #{tpu_custom_call.1} parent=5 // pred_check_branch
        %225 = sbr.rel (%p223) target = $region32
      $region31: #{tpu_custom_call.1} parent=5 // pred_region
        // Predicated region
        $region33: #{tpu_custom_call.1} parent=31 // pred_check
          %p226 = pneg %p53
        $region34: #{tpu_custom_call.1} parent=31 // pred_check_branch
          %228 = sbr.rel (%p226) target = $region36
        $region35: #{tpu_custom_call.1} parent=31 // pred_region
          %s229 = smul.u32 2, %s27
          %p230 = scmp.lt.s32.totalorder %s26, 1
          %s231 = scalar_select %p230, %s26, 1
          %p232 = scmp.lt.s32.totalorder %s229, 7
          %s233 = scalar_select %p232, %s229, 7
          %s234 = smul.addr %s231, 8
          %s235 = sadd.s32 %s233, %s234
          %s236 = smul.addr %s235, 8
          %s237 = scalar_lea.vmem %s0, %s236
          %s238 = smul.u32 2, %s27
        $region36: #{tpu_custom_call.1} parent=31 // pred_fallthru
          _
      $region32: #{tpu_custom_call.1} parent=5 // pred_fallthru
        _
      %p239 = scmp.le.s32.totalorder 1, %s19
      %p240 = scmp.lt.s32.totalorder %s19, 9
      %p241 = pnand %p239, %p240
      %p242 = pneg %p241
      // Predicated region
      $region37: #{tpu_custom_call.1} parent=5 // pred_check
        _
      $region38: #{tpu_custom_call.1} parent=5 // pred_check_branch
        %244 = sbr.rel (%p241) target = $region40
      $region39: #{tpu_custom_call.1} parent=5 // pred_region
        %s245 = ssub.s32 %s19, 1
        %s246 = smul.u32 2, %s29
        %p247 = scmp.lt.s32.totalorder %s28, 1
        %s248 = scalar_select %p247, %s28, 1
        %p249 = scmp.lt.s32.totalorder %s246, 7
        %s250 = scalar_select %p249, %s246, 7
        %s251 = smul.addr %s248, 8
        %s252 = sadd.s32 %s250, %s251
        %s253 = smul.addr %s252, 8
        %s254 = scalar_lea.vmem %s0, %s253
        %p255 = pneg %p59
        %p256 = pneg %p56
        %p257 = pneg %p80
        %p258 = pneg %p77
        %p259 = pneg %p101
        %p260 = pneg %p98
        %p261 = pneg %p122
        %p262 = pneg %p119
        %p263 = pneg %p143
        %p264 = pneg %p140
        %p265 = pneg %p169
        %p266 = pneg %p166
        %s267 = sand.u32 %s156, 1
        %s268 = scalar_lea.sflag [#allocation5], %s267
        %s269 = sand.u32 %s156, 1
        %s270 = scalar_lea.vmem [#allocation4], %s269
        %p271 = pneg %p195
        %p272 = pneg %p192
        %s273 = sand.u32 %s182, 1
        %s274 = scalar_lea.sflag [#allocation7], %s273
        %s275 = sand.u32 %s182, 1
        %s276 = scalar_lea.vmem [#allocation6], %s275
        %s277 = smul.u32 2, %s29
        %p278 = scmp.lt.s32.totalorder %s28, 1
        %s279 = scalar_select %p278, %s28, 1
        %p280 = scmp.lt.s32.totalorder %s277, 7
        %s281 = scalar_select %p280, %s277, 7
        %s282 = smul.addr %s279, 8
        %s283 = sadd.s32 %s281, %s282
        %s284 = smul.addr %s283, 8
        %s285 = scalar_lea.vmem %s0, %s284
        %s286 = smul.u32 2, %s29
        %p287 = scmp.eq.s32.totalorder %s29, 0
        // Predicated region
        $region41: #{tpu_custom_call.1} parent=39 // pred_check
          %p288 = pneg %p287
        $region42: #{tpu_custom_call.1} parent=39 // pred_check_branch
          %290 = sbr.rel (%p288) target = $region44
        $region43: #{tpu_custom_call.1} parent=39 // pred_region
          %vm291 = vcmask 253952
          %292 = vst.msk [vmem:[#allocation2] sm:$0x1] %vm291, 0.0
          %vm293 = vcmask 0
          %294 = vst.msk [vmem:[#allocation3] sm:$0x1] %vm293, 0.0
        $region44: #{tpu_custom_call.1} parent=39 // pred_fallthru
          _
        %v295 = vld [vmem:[%s285] sm:$0xff]
        %v296 = vld [vmem:[%s285 + $0x8] sm:$0xff]
        %vm297 = vcmask 261120
        %v298 = vsel %vm297, %v295, 0.0
        %299 = vadd.xlane.f32.xlu0 %v298
        %v300 = vpop.xlane.xlu0 %299
        %v301 = vsel %vm297, %v296, 0.0
        %302 = vadd.xlane.f32.xlu0 %v301
        %v303 = vpop.xlane.xlu0 %302
        %v304 = vmul.f32 %v295, %v295
        %v305 = vmul.f32 %v296, %v296
        %v306 = vsel %vm297, %v304, 0.0
        %307 = vadd.xlane.f32.xlu0 %v306
        %v308 = vpop.xlane.xlu0 %307
        %v309 = vsel %vm297, %v305, 0.0
        %310 = vadd.xlane.f32.xlu0 %v309
        %v311 = vpop.xlane.xlu0 %310
        %v312 = vmul.f32 %v300, 0.03125
        %v313 = vmul.f32 %v303, 0.03125
        %v314 = vmul.f32 %v308, 0.03125
        %v315 = vmul.f32 %v311, 0.03125
        %v316 = vmul.f32 %v312, %v312
        %v317 = vmul.f32 %v313, %v313
        %v318 = vsub.f32 %v314, %v316
        %v319 = vsub.f32 %v315, %v317
        %v320 = vadd.f32 %v318, 1e-05
        %v321 = vadd.f32 %v319, 1e-05
        %v322 = vrsqrt.pop %v320
        %v323 = vrsqrt.pop %v321
        %v324 = vmul.f32 %v295, %v322
        %v325 = vmul.f32 %v296, %v323
        %v326 = vmul.f32 %v312, %v322
        %v327 = vmul.f32 %v313, %v323
        %v328 = vld [vmem:[#allocation2] sm:$0x1]
        %v329 = vsel %vm297, %v324, 0.0
        %v330 = vsel %vm297, %v325, 0.0
        %v331 = vadd.f32 %v329, %v330
        %v332 = vrot.slane %v331, 4
        %v333 = vadd.f32 %v331, %v332
        %v334 = vrot.slane %v333, 2
        %v335 = vadd.f32 %v333, %v334
        %v336 = vrot.slane %v335, 1
        %v337 = vadd.f32 %v335, %v336
        %v338 = vadd.f32 %v328, %v337
        %vm339 = vcmask 253952
        %340 = vst.msk [vmem:[#allocation2] sm:$0x1] %vm339, %v338
        %v341 = vld [vmem:[#allocation3] sm:$0x1]
        %v342 = vadd.f32 %v326, %v327
        %v343 = vrot.slane %v342, 4
        %v344 = vadd.f32 %v342, %v343
        %v345 = vrot.slane %v344, 2
        %v346 = vadd.f32 %v344, %v345
        %v347 = vrot.slane %v346, 1
        %v348 = vadd.f32 %v346, %v347
        %v349 = vadd.f32 %v341, %v348
        %vm350 = vcmask 0
        %351 = vst.msk [vmem:[#allocation3] sm:$0x1] %vm350, %v349
        %p352 = scmp.eq.s32.totalorder %s29, 3
        // Predicated region
        $region45: #{tpu_custom_call.1} parent=39 // pred_check
          %p353 = pneg %p352
        $region46: #{tpu_custom_call.1} parent=39 // pred_check_branch
          %355 = sbr.rel (%p353) target = $region48
        $region47: #{tpu_custom_call.1} parent=39 // pred_region
          %v356 = vld [vmem:[#allocation2] sm:$0x1]
          %v357 = vld [vmem:[#allocation3] sm:$0x1]
          %359 = vset.pattern.permute.xlu0 0
          %360 = vperm.xlu0 %359, %v357
          %v361 = vpop.permute.xlu0 %360
          %v363 = vlaneseq
          %v364 = vshrl.u32 %v363, 7
          %v365 = vsub.s32 0, %v364
          %v366 = vrot.slane %v361, %v365
          %v367 = vsub.f32 %v356, %v366
          %v368 = vmul.f32 %v367, 0.015625
          %v369 = vld [vmem:[%s1] sm:$0x1]
          %v370 = vmul.f32 %v368, %v369
          %v371 = vld [vmem:[%s2] sm:$0x1]
          %v372 = vadd.f32 %v370, %v371
          %373 = vst.msk [vmem:[%s276] sm:$0x1] %vm339, %v372
          %v374 = vld [vmem:[%s3] sm:$0xff]
          %v375 = vld [vmem:[%s3 + $0x8] sm:$0xff]
          %v376 = vld [vmem:[%s3 + $0x10] sm:$0xff]
          %v377 = vld [vmem:[%s3 + $0x18] sm:$0xff]
          %v378 = vld [vmem:[%s4] sm:$0x1]
          %v380 = vsel %vm297, %v372, 0
          %382 = vmatprep.subr.mxu0 0.0
          %383 = vmatpush1.msra.mxu0 0.0
          %384 = vmatprep.subr.mxu0 0.0
          %385 = vmatpush1.msra.mxu0 0.0
          %386 = vmatprep.subr.mxu0 0.0
          %387 = vmatpush1.msra.mxu0 0.0
          %388 = vmatprep.subr.mxu0 0.0
          %389 = vmatpush1.msra.mxu0 0.0
          %390 = vmatprep.subr.mxu0 0.0
          %391 = vmatpush1.msra.mxu0 0.0
          %392 = vmatprep.subr.mxu0 0.0
          %393 = vmatpush1.msra.mxu0 0.0
          %394 = vmatprep.subr.mxu0 0.0
          %395 = vmatpush1.msra.mxu0 0.0
          %396 = vmatprep.subr.mxu0 0.0
          %397 = vmatpush1.msra.mxu0 0.0
          %398 = vmatprep.subr.mxu0 0.0
          %399 = vmatpush1.msra.mxu0 0.0
          %400 = vmatprep.subr.mxu0 0.0
          %401 = vmatpush1.msra.mxu0 0.0
          %402 = vmatprep.subr.mxu0 0.0
          %403 = vmatpush1.msra.mxu0 0.0
          %404 = vmatprep.subr.mxu0 0.0
          %405 = vmatpush1.msra.mxu0 0.0
          %406 = vmatprep.subr.mxu0 0.0
          %407 = vmatpush1.msra.mxu0 %v377
          %408 = vmatprep.subr.mxu0 0.0
          %409 = vmatpush1.msra.mxu0 %v376
          %410 = vmatprep.subr.mxu0 0.0
          %411 = vmatpush1.msra.mxu0 %v375
          %412 = vmatprep.subr.mxu0 0.0
          %413 = vmatpush1.msra.mxu0 %v374
          %414 = vmatprep.subr.mxu0 0.0
          %415 = vmatpush2.msra.mxu0 0.0
          %416 = vmatprep.subr.mxu0 0.0
          %417 = vmatpush2.msra.mxu0 0.0
          %418 = vmatprep.subr.mxu0 0.0
          %419 = vmatpush2.msra.mxu0 0.0
          %420 = vmatprep.subr.mxu0 0.0
          %421 = vmatpush2.msra.mxu0 0.0
          %422 = vmatprep.subr.mxu0 0.0
          %423 = vmatpush2.msra.mxu0 0.0
          %424 = vmatprep.subr.mxu0 0.0
          %425 = vmatpush2.msra.mxu0 0.0
          %426 = vmatprep.subr.mxu0 0.0
          %427 = vmatpush2.msra.mxu0 0.0
          %428 = vmatprep.subr.mxu0 0.0
          %429 = vmatpush2.msra.mxu0 0.0
          %430 = vmatprep.subr.mxu0 0.0
          %431 = vmatpush2.msra.mxu0 0.0
          %432 = vmatprep.subr.mxu0 0.0
          %433 = vmatpush2.msra.mxu0 0.0
          %434 = vmatprep.subr.mxu0 0.0
          %435 = vmatpush2.msra.mxu0 0.0
          %436 = vmatprep.subr.mxu0 0.0
          %437 = vmatpush2.msra.mxu0 0.0
          %438 = vmatprep.subr.mxu0 0.0
          %439 = vmatpush2.msra.mxu0 0.0
          %440 = vmatprep.subr.mxu0 0.0
          %441 = vmatpush2.msra.mxu0 0.0
          %442 = vmatprep.subr.mxu0 0.0
          %443 = vmatpush2.msra.mxu0 0.0
          %444 = vmatprep.subr.mxu0 0.0
          %445 = vmatpush2.msra.mxu0 0.0
          %446 = vmatprep.mubr.f32.mxu0 0.0
          %447 = vmatmul.mubr.f32.gmra.mxu0 %v380
          %v448 = vpop.f32.mrf.mxu0
          %v449 = vadd.f32 %v378, %v448
          %v450 = vpop.f32.mrf.mxu0
          %451 = vdwg.mxu0
          %vm452 = vcmask 73728
          %453 = vst.msk [vmem:[%s270] sm:$0x1] %vm452, %v449
        $region48: #{tpu_custom_call.1} parent=39 // pred_fallthru
          _
        %s454 = sand.u32 %s156, 1
        %s455 = scalar_lea.sflag [#allocation5], %s454
        %s456 = sand.u32 %s156, 1
        %s457 = scalar_lea.vmem [#allocation4], %s456
        %s458 = sand.u32 %s182, 1
        %s459 = scalar_lea.sflag [#allocation7], %s458
        %s460 = sand.u32 %s182, 1
        %s461 = scalar_lea.vmem [#allocation6], %s460
        // Predicated region
        $region49: #{tpu_custom_call.1} parent=39 // pred_check
          %p462 = pneg %p166
        $region50: #{tpu_custom_call.1} parent=39 // pred_check_branch
          %464 = sbr.rel (%p462) target = $region52
        $region51: #{tpu_custom_call.1} parent=39 // pred_region
          %s466 = ssub.s32 16, 16
          %467 = vsyncadd %s455, %s466
          %s468 = smul.addr %s28, 16
          %s469 = scalar_lea.hbm %s5, %s468
          %s471 = sshll.u32 %s457, 4
          %s472 = int_to_ptr.vmem [resolvable:$true] %s471
          %474 = dma.vmem_to_hbm [thread:$0]  %s472, 16, %s469, %s455
        $region52: #{tpu_custom_call.1} parent=39 // pred_fallthru
          _
        // Predicated region
        $region53: #{tpu_custom_call.1} parent=39 // pred_check
          %p475 = pneg %p192
        $region54: #{tpu_custom_call.1} parent=39 // pred_check_branch
          %477 = sbr.rel (%p475) target = $region56
        $region55: #{tpu_custom_call.1} parent=39 // pred_region
          %s479 = ssub.s32 16, 16
          %480 = vsyncadd %s459, %s479
          %s481 = smul.addr %s28, 16
          %s482 = scalar_lea.hbm %s6, %s481
          %s484 = sshll.u32 %s461, 4
          %s485 = int_to_ptr.vmem [resolvable:$true] %s484
          %487 = dma.vmem_to_hbm [thread:$0]  %s485, 16, %s482, %s459
        $region56: #{tpu_custom_call.1} parent=39 // pred_fallthru
          _
      $region40: #{tpu_custom_call.1} parent=5 // pred_fallthru
        _
      %p488 = scmp.le.s32.totalorder 2, %s19
      // Predicated region
      $region57: #{tpu_custom_call.1} parent=5 // pred_check
        %p489 = pneg %p488
      $region58: #{tpu_custom_call.1} parent=5 // pred_check_branch
        %491 = sbr.rel (%p489) target = $region60
      $region59: #{tpu_custom_call.1} parent=5 // pred_region
        %s492 = ssub.s32 %s19, 2
        // Predicated region
        $region61: #{tpu_custom_call.1} parent=59 // pred_check
          %p493 = pneg %p172
        $region62: #{tpu_custom_call.1} parent=59 // pred_check_branch
          %495 = sbr.rel (%p493) target = $region64
        $region63: #{tpu_custom_call.1} parent=59 // pred_region
          %s496 = sand.u32 %s157, 1
          %s497 = scalar_lea.sflag [#allocation5], %s496
          %s498 = sand.u32 %s157, 1
          %s499 = scalar_lea.vmem [#allocation4], %s498
          %500 = dma.done %s497, 16
        $region64: #{tpu_custom_call.1} parent=59 // pred_fallthru
          _
        // Predicated region
        $region65: #{tpu_custom_call.1} parent=59 // pred_check
          %p501 = pneg %p198
        $region66: #{tpu_custom_call.1} parent=59 // pred_check_branch
          %503 = sbr.rel (%p501) target = $region68
        $region67: #{tpu_custom_call.1} parent=59 // pred_region
          %s504 = sand.u32 %s183, 1
          %s505 = scalar_lea.sflag [#allocation7], %s504
          %s506 = sand.u32 %s183, 1
          %s507 = scalar_lea.vmem [#allocation6], %s506
          %508 = dma.done %s505, 16
        $region68: #{tpu_custom_call.1} parent=59 // pred_fallthru
          _
      $region60: #{tpu_custom_call.1} parent=5 // pred_fallthru
        _
    $region6: #{tpu_custom_call.1} parent=1 // loop_footer
      %s23 = sadd.s32 1, %s19
    $region7: #{tpu_custom_call.1} parent=1 // loop_footer_branch
      %18 = sbr.rel target = $region3
    $region8: #{tpu_custom_call.1} parent=1 // loop_exit
      _
    %509 = vsyncpa [#allocation5], 1
    %s510 = scalar_lea.sflag [#allocation5], 1
    %511 = vsyncpa %s510, 1
    %512 = vsyncpa [#allocation7], 1
    %s513 = scalar_lea.sflag [#allocation7], 1
    %514 = vsyncpa %s513, 1

</llo_original>
